<compile_context>
chip_gen: v5e
topology: v5e:2x2
jax: 0.10.0
libtpu: 0.0.40
codegen_flags: <defaults>
</compile_context>

<pallas_src>
import math

import jax
import jax.numpy as jnp
from jax import lax
from jax.experimental import pallas as pl
from jax.experimental.pallas import tpu as pltpu

_INV_SQRT2 = 0.7071067811865476  # 1/sqrt(2), precomputed (avoid an EUP divide)


def _erf_gelu(y):
    # ESM-style GELU (exact erf form, NOT the tanh approximation), computed in f32.
    return y * 0.5 * (1.0 + lax.erf(y * jnp.float32(_INV_SQRT2)))


def _round_up(x, m):
    return (x + m - 1) // m * m


def _pad2d(a, rows, cols):
    r, c = a.shape
    if r == rows and c == cols:
        return a
    return jnp.pad(a, ((0, rows - r), (0, cols - c)))


def _largest_divisor_tile(padded, target, align):
    """Largest multiple of `align` that divides `padded` and is <= target."""
    units = padded // align
    target_units = max(1, target // align)
    best = 1
    for d in range(1, units + 1):
        if units % d == 0 and d <= target_units:
            best = d
    return best * align


def _pick_tile_and_pad(dim, target, align):
    """Return (tile, padded_dim).  Pad only to `align` and use a divisor tile;
    fall back to padding to a tile multiple only when the divisor tile would be
    pathologically small (awkward prime factors)."""
    target = max(target, align)
    pad_min = _round_up(dim, align)
    if pad_min <= target:
        return pad_min, pad_min
    tile = _largest_divisor_tile(pad_min, target, align)
    if tile * 4 < target:  # pathological factorization -> accept a little padding
        return target, _round_up(dim, target)
    return tile, pad_min


_VMEM_LIMIT_CACHE = None


def _vmem_limit_bytes():
    """VMEM budget for the kernel: ~60% of physical when queryable, else 48 MiB
    (safe on v5e/v6e 128 MiB and v7x 64 MiB)."""
    global _VMEM_LIMIT_CACHE
    if _VMEM_LIMIT_CACHE is not None:
        return _VMEM_LIMIT_CACHE
    cap = None
    try:
        info = pltpu.get_tpu_info()
        cap = int(getattr(info, "vmem_capacity_bytes", 0)) or None
    except Exception:
        cap = None
    if cap is None:
        limit = 48 * 1024 * 1024
    else:
        limit = int(min(cap * 0.6, 100 * 1024 * 1024))
    _VMEM_LIMIT_CACHE = limit
    return limit


# ---------------------------------------------------------------------------
# Single-layer kernels: y = gelu(x @ W + b)
# ---------------------------------------------------------------------------
def _linear_gelu_kernel_single_k(x_ref, w_ref, b_ref, o_ref):
    # Whole K reduction in one shot: no scratch accumulator, no cold branches.
    acc = jnp.dot(x_ref[...], w_ref[...], preferred_element_type=jnp.float32)
    o_ref[...] = _erf_gelu(acc + b_ref[...].astype(jnp.float32)).astype(o_ref.dtype)


def _linear_gelu_kernel_ksplit(x_ref, w_ref, b_ref, o_ref, acc_ref):
    k = pl.program_id(2)

    @pl.when(k == 0)
    def _init():
        acc_ref[...] = jnp.zeros_like(acc_ref)

    acc_ref[...] += jnp.dot(x_ref[...], w_ref[...], preferred_element_type=jnp.float32)

    @pl.when(k == pl.num_programs(2) - 1)
    def _epilogue():
        y = acc_ref[...] + b_ref[...].astype(jnp.float32)
        o_ref[...] = _erf_gelu(y).astype(o_ref.dtype)


def linear_gelu_tiled(x, w, b, *, out_dtype=None, use_bf16_matmul=False,
                      tm=512, tn=512, tk=2048, out_rows=None, keep_padded=False):
    """One fused (Linear + erf-GELU) layer.

    x:(Mx, Kx) where Kx >= w.shape[0]; extra x columns are multiplied by the
    zero-padded weight rows, so already-padded inputs (from a previous layer with
    keep_padded=True) are handled exactly.  w:(K, N), b:(N,).
    """
    Mx, Kx = x.shape
    Kw, N = w.shape
    assert Kx >= Kw and b.shape == (N,)
    out_dtype = out_dtype or x.dtype
    out_rows = Mx if out_rows is None else out_rows

    align_m = 16 if use_bf16_matmul else 8
    K = max(Kw, Kx)

    tk_sel, Kp = _pick_tile_and_pad(K, tk, 128)
    tn_sel, Np = _pick_tile_and_pad(N, tn, 128)
    tm_sel, Mp = _pick_tile_and_pad(Mx, tm, align_m)

    # v7x: make sure there are >=2 parallel grid steps so both TensorCores get work.
    if (Mp // tm_sel) * (Np // tn_sel) < 2:
        if Mp >= 2 * align_m:
            Mp = _round_up(Mp, 2 * align_m)
            tm_sel = Mp // 2
        elif Np >= 256:
            Np = _round_up(Np, 256)
            tn_sel = Np // 2

    if use_bf16_matmul:
        x = x.astype(jnp.bfloat16)
        w = w.astype(jnp.bfloat16)

    xp = _pad2d(x, Mp, Kp)
    wp = _pad2d(w, Kp, Np)
    bp = _pad2d(b.reshape(1, N).astype(jnp.float32), 1, Np)

    grid_m, grid_n, k_steps = Mp // tm_sel, Np // tn_sel, Kp // tk_sel

    # Cost estimate reflects actual re-streaming (x read grid_n times, w read grid_m times).
    bytes_accessed = (xp.size * xp.dtype.itemsize * grid_n
                      + wp.size * wp.dtype.itemsize * grid_m
                      + bp.size * bp.dtype.itemsize * grid_m
                      + Mp * Np * jnp.dtype(out_dtype).itemsize)
    cost = pl.CostEstimate(flops=2 * Mp * Np * Kp,
                           transcendentals=Mp * Np,
                           bytes_accessed=int(bytes_accessed))

    if k_steps == 1:
        grid = (grid_m, grid_n)
        kernel = _linear_gelu_kernel_single_k
        in_specs = [pl.BlockSpec((tm_sel, Kp), lambda i, j: (i, 0)),
                    pl.BlockSpec((Kp, tn_sel), lambda i, j: (0, j)),
                    pl.BlockSpec((1, tn_sel), lambda i, j: (0, j))]
        out_specs = pl.BlockSpec((tm_sel, tn_sel), lambda i, j: (i, j))
        scratch = []
        dims = ("parallel", "parallel")
    else:
        grid = (grid_m, grid_n, k_steps)
        kernel = _linear_gelu_kernel_ksplit
        in_specs = [pl.BlockSpec((tm_sel, tk_sel), lambda i, j, k: (i, k)),
                    pl.BlockSpec((tk_sel, tn_sel), lambda i, j, k: (k, j)),
                    pl.BlockSpec((1, tn_sel), lambda i, j, k: (0, j))]
        out_specs = pl.BlockSpec((tm_sel, tn_sel), lambda i, j, k: (i, j))
        scratch = [pltpu.VMEM((tm_sel, tn_sel), jnp.float32)]
        dims = ("parallel", "parallel", "arbitrary")

    out = pl.pallas_call(
        kernel,
        out_shape=jax.ShapeDtypeStruct((Mp, Np), out_dtype),
        grid_spec=pltpu.PrefetchScalarGridSpec(
            num_scalar_prefetch=0,
            grid=grid,
            in_specs=in_specs,
            out_specs=out_specs,
            scratch_shapes=scratch,
        ),
        compiler_params=pltpu.CompilerParams(
            dimension_semantics=dims,
            vmem_limit_bytes=_vmem_limit_bytes(),
        ),
        cost_estimate=cost,
    )(xp, wp, bp)

    if keep_padded:
        return out
    return out[:out_rows, :N]


# ---------------------------------------------------------------------------
# Fully fused multi-layer kernel: the whole stack in one pallas_call.
# Intermediate activations never leave VMEM; grid only over row tiles of M.
# ---------------------------------------------------------------------------
def _make_fused_kernel(num_layers, compute_dtype):
    def kernel(x_ref, *refs):
        wb = refs[:2 * num_layers]
        o_ref = refs[-1]
        h = x_ref[...]                       # already compute_dtype (wrapper cast)
        for l in range(num_layers):
            acc = jnp.dot(h, wb[2 * l][...], preferred_element_type=jnp.float32)
            y = _erf_gelu(acc + wb[2 * l + 1][...])      # f32 bias + erf-GELU
            h = y if l == num_layers - 1 else y.astype(compute_dtype)
        o_ref[...] = h.astype(o_ref.dtype)
    return kernel


def multilayer_linear_fused(x2, params, *, out_dtype=None,
                            use_bf16_matmul=False, tm=512):
    """Whole layer stack fused into one kernel.  x2:(M, in_features[0])."""
    M, _ = x2.shape
    out_dtype = out_dtype or x2.dtype
    num_layers = len(params)
    compute_dtype = jnp.bfloat16 if use_bf16_matmul else jnp.float32

    feats = [x2.shape[1]] + [w.shape[1] for (w, _) in params]
    feats_p = [_round_up(f, 128) for f in feats]          # lane-dense everywhere

    # Cast constants (and x) in the wrapper: halves weight DMA bytes / VMEM residency
    # when bf16 and removes the in-kernel full-tile cast.
    if use_bf16_matmul:
        x2 = x2.astype(jnp.bfloat16)
    wb = []
    for l, (w, b) in enumerate(params):
        wl = w.astype(compute_dtype) if use_bf16_matmul else w
        wb.append(_pad2d(wl, feats_p[l], feats_p[l + 1]))
        wb.append(_pad2d(b.reshape(1, -1).astype(jnp.float32), 1, feats_p[l + 1]))

    weight_bytes = sum(a.size * a.dtype.itemsize for a in wb)
    x_item = jnp.dtype(x2.dtype).itemsize
    out_item = jnp.dtype(out_dtype).itemsize
    vmem_budget = _vmem_limit_bytes()
    align_m = 16 if use_bf16_matmul else 8

    # Row-tile size: big, but keep (weights[x2 if double-buffered] + in/out double
    # buffers + f32 temporaries) under the VMEM budget.
    bytes_per_row = 2 * (feats_p[0] * x_item + feats_p[-1] * out_item) + 3 * max(feats_p) * 4
    tm_target = min(tm, _round_up(M, align_m))
    while tm_target > align_m and 2 * weight_bytes + tm_target * bytes_per_row > vmem_budget:
        tm_target = max(align_m, tm_target // 2)

    tm_sel, Mp = _pick_tile_and_pad(M, tm_target, align_m)
    # v7x: >=2 parallel grid steps so both TensorCores get work.
    if Mp // tm_sel < 2 and Mp >= 2 * align_m:
        Mp = _round_up(Mp, 2 * align_m)
        tm_sel = Mp // 2

    xp = _pad2d(x2, Mp, feats_p[0])
    grid = (Mp // tm_sel,)
    kernel = _make_fused_kernel(num_layers, compute_dtype)

    flops = sum(2 * Mp * feats_p[l] * feats_p[l + 1] for l in range(num_layers))
    trans = sum(Mp * feats_p[l + 1] for l in range(num_layers))
    bytes_accessed = (xp.size * xp.dtype.itemsize + weight_bytes
                      + Mp * feats_p[-1] * out_item)
    cost = pl.CostEstimate(flops=int(flops), transcendentals=int(trans),
                           bytes_accessed=int(bytes_accessed))

    def _call(single_buffer_consts):
        # Weights/biases have a constant index_map (never change across the grid):
        # single-buffer them to halve their VMEM footprint when supported.
        const_kwargs = dict(pipeline_mode=pl.Buffered(1)) if single_buffer_consts else {}
        in_specs = [pl.BlockSpec((tm_sel, feats_p[0]), lambda i: (i, 0))]
        for l in range(num_layers):
            kp, npad = feats_p[l], feats_p[l + 1]
            in_specs.append(pl.BlockSpec((kp, npad), lambda i: (0, 0), **const_kwargs))
            in_specs.append(pl.BlockSpec((1, npad), lambda i: (0, 0), **const_kwargs))
        return pl.pallas_call(
            kernel,
            out_shape=jax.ShapeDtypeStruct((Mp, feats_p[-1]), out_dtype),
            grid_spec=pltpu.PrefetchScalarGridSpec(
                num_scalar_prefetch=0,
                grid=grid,
                in_specs=in_specs,
                out_specs=pl.BlockSpec((tm_sel, feats_p[-1]), lambda i: (i, 0)),
            ),
            compiler_params=pltpu.CompilerParams(
                dimension_semantics=("parallel",),
                vmem_limit_bytes=vmem_budget,
            ),
            cost_estimate=cost,
        )(xp, *wb)

    try:
        out = _call(True)
    except Exception:
        out = _call(False)   # fall back to default double-buffering of constants

    return out[:M, :feats[-1]]


# ---------------------------------------------------------------------------
# Chained (non-fused) path: per-layer tiled kernel, padded activations carried
# between layers (no slice + re-pad), bf16 intermediates when requested.
# ---------------------------------------------------------------------------
def multilayer_linear_chained(x2, params, *, out_dtype=None,
                              use_bf16_matmul=False, tm=512, tn=512, tk=2048):
    M = x2.shape[0]
    out_dtype = out_dtype or x2.dtype
    inter_dtype = jnp.bfloat16 if use_bf16_matmul else x2.dtype
    n = len(params)
    y = x2
    for l, (w, b) in enumerate(params):
        last = (l == n - 1)
        y = linear_gelu_tiled(
            y, w, b,
            out_dtype=out_dtype if last else inter_dtype,
            use_bf16_matmul=use_bf16_matmul,
            tm=tm, tn=tn, tk=tk,
            out_rows=M, keep_padded=not last)
    return y


# ---------------------------------------------------------------------------
# Module-level forward + init
# ---------------------------------------------------------------------------
def init_multilayer_linear_params(key, in_features, out_features):
    """nn.Linear-shaped params; weight stored as (in, out) == PyTorch (out, in).T."""
    params = []
    for fin, fout in zip(in_features, out_features):
        kw, kb, key = jax.random.split(key, 3)
        bound = 1.0 / math.sqrt(fin)  # PyTorch nn.Linear default uniform bound
        w = jax.random.uniform(kw, (fin, fout), jnp.float32, -bound, bound)
        b = jax.random.uniform(kb, (fout,), jnp.float32, -bound, bound)
        params.append((w, b))
    return params


def multilayer_linear_forward(x, params, dropout=0.0, use_bf16_matmul=False):
    """MultiLayerLinear.forward: x = gelu(Linear(x)) per layer."""
    orig_shape = x.shape
    x2 = x.reshape(-1, orig_shape[-1])
    out_dtype = x.dtype

    # Fuse the whole stack when the (padded) weights comfortably fit resident in VMEM;
    # the fused path keeps every intermediate activation out of HBM.
    feats = [x2.shape[1]] + [w.shape[1] for (w, _) in params]
    feats_p = [_round_up(f, 128) for f in feats]
    w_item = 2 if use_bf16_matmul else 4
    weight_bytes = sum(feats_p[l] * feats_p[l + 1] * w_item for l in range(len(params)))
    vmem_budget = _vmem_limit_bytes()
    fuse = (max(feats_p) <= 2048) and (weight_bytes <= min(12 * 1024 * 1024, vmem_budget // 3))

    if fuse:
        y2 = multilayer_linear_fused(x2, params, out_dtype=out_dtype,
                                     use_bf16_matmul=use_bf16_matmul)
    else:
        y2 = multilayer_linear_chained(x2, params, out_dtype=out_dtype,
                                       use_bf16_matmul=use_bf16_matmul)

    # TODO(synk): train-mode dropout (Bernoulli masking via pltpu.prng_seed/prng_random_bits)
    # not applied; the module's default dropout=0 path is implemented.
    return y2.reshape(orig_shape[:-1] + (y2.shape[-1],))


def _reference_forward(x, params):
    x2 = x.reshape(-1, x.shape[-1]).astype(jnp.float32)
    for (w, b) in params:
        x2 = _erf_gelu(x2 @ w + b)
    return x2.reshape(x.shape[:-1] + (x2.shape[-1],))


if __name__ == "__main__":
    key = jax.random.PRNGKey(0)

    # --- Case 1: module's toy config (fully fused path).
    #     batch=2, seq=8, num_layers=2, in_features=[32, 64], out_features=[64, 32]
    kx, kp, key = jax.random.split(key, 3)
    batch, seq = 2, 8
    in_features, out_features = [32, 64], [64, 32]
    x = jax.random.normal(kx, (batch, seq, in_features[0]), dtype=jnp.float32)
    params = init_multilayer_linear_params(kp, in_features, out_features)

    out = jax.block_until_ready(multilayer_linear_forward(x, params, dropout=0.0))
    ref = _reference_forward(x, params)
    assert out.shape == (batch, seq, out_features[-1])
    assert jnp.allclose(out, ref, atol=1e-5, rtol=1e-5)

    # --- Case 2: larger, non-aligned shapes (M=200, K=640, N=384->96).
    kx2, kp2, key = jax.random.split(key, 3)
    in2, out2 = [640, 384], [384, 96]
    x_big = jax.random.normal(kx2, (4, 50, in2[0]), dtype=jnp.float32)  # M = 200
    params2 = init_multilayer_linear_params(kp2, in2, out2)
    ref2 = _reference_forward(x_big, params2).reshape(-1, out2[-1])

    # 2a: forward (fused path, these weights fit VMEM easily).
    out2_fwd = jax.block_until_ready(multilayer_linear_forward(x_big, params2))
    assert out2_fwd.shape == (4, 50, out2[-1])
    assert jnp.allclose(out2_fwd.reshape(-1, out2[-1]), ref2, atol=1e-3, rtol=1e-3)

    # 2b: chained tiled path, single-K kernel (Kp=640 fits -> no K grid axis).
    y_tiled = jax.block_until_ready(
        multilayer_linear_chained(x_big.reshape(-1, in2[0]), params2))
    assert jnp.allclose(y_tiled, ref2, atol=1e-3, rtol=1e-3)

    # 2c: chained tiled path with a forced K split (exercises the accumulator kernel).
    y_ksplit = jax.block_until_ready(
        multilayer_linear_chained(x_big.reshape(-1, in2[0]), params2, tk=256))
    assert jnp.allclose(y_ksplit, ref2, atol=1e-3, rtol=1e-3)

    # --- Case 3: bf16 MXU inputs with f32 accumulation (perf path), relaxed tolerance.
    y_bf16 = jax.block_until_ready(
        multilayer_linear_chained(x_big.reshape(-1, in2[0]), params2,
                                  use_bf16_matmul=True))
    assert jnp.allclose(y_bf16.astype(jnp.float32), ref2, atol=5e-2, rtol=5e-2)

    y_bf16_fused = jax.block_until_ready(
        multilayer_linear_forward(x_big, params2, use_bf16_matmul=True))
    assert jnp.allclose(y_bf16_fused.reshape(-1, out2[-1]).astype(jnp.float32),
                        ref2, atol=5e-2, rtol=5e-2)

    print("KERNEL_OK")
</pallas_src>

<mosaic_0001>
module attributes {stable_mosaic.version = 11 : i64} {
  func.func @kernel(%arg0: i32, %arg1: memref<8x128xf32, #tpu.memory_space<vmem>>, %arg2: memref<128x128xf32, #tpu.memory_space<vmem>>, %arg3: memref<1x128xf32, #tpu.memory_space<vmem>>, %arg4: memref<128x128xf32, #tpu.memory_space<vmem>>, %arg5: memref<1x128xf32, #tpu.memory_space<vmem>>, %arg6: memref<8x128xf32, #tpu.memory_space<vmem>>) attributes {dimension_semantics = [#tpu.dimension_semantics<parallel>], iteration_bounds = array<i64: 2>, scalar_prefetch = 0 : i64, scratch_operands = 0 : i64, tpu.core_type = #tpu.core_type<tc>, window_params = [{transform_indices = @transform_0, window_bounds = array<i64: 8, 128>}, {pipeline_mode = #tpu.pipeline_mode<synchronous>, transform_indices = @transform_1, window_bounds = array<i64: 128, 128>}, {pipeline_mode = #tpu.pipeline_mode<synchronous>, transform_indices = @transform_2, window_bounds = array<i64: 1, 128>}, {pipeline_mode = #tpu.pipeline_mode<synchronous>, transform_indices = @transform_3, window_bounds = array<i64: 128, 128>}, {pipeline_mode = #tpu.pipeline_mode<synchronous>, transform_indices = @transform_4, window_bounds = array<i64: 1, 128>}, {transform_indices = @transform_5, window_bounds = array<i64: 8, 128>}]} {
    %c0 = arith.constant 0 : index
    %c0_0 = arith.constant 0 : index
    %0 = vector.load %arg1[%c0, %c0_0] : memref<8x128xf32, #tpu.memory_space<vmem>>, vector<8x128xf32>
    %c0_1 = arith.constant 0 : index
    %c0_2 = arith.constant 0 : index
    %1 = vector.load %arg2[%c0_1, %c0_2] : memref<128x128xf32, #tpu.memory_space<vmem>>, vector<128x128xf32>
    %cst = arith.constant dense<0.000000e+00> : vector<8x128xf32>
    %2 = tpu.matmul %0, %1, %cst {dimension_numbers = #tpu.dot_dimension_numbers<[1], [0], [0], [1], [0, 0, 1, 1], [], []>} : vector<8x128xf32>, vector<128x128xf32>, vector<8x128xf32> -> vector<8x128xf32>
    %c0_3 = arith.constant 0 : index
    %c0_4 = arith.constant 0 : index
    %3 = vector.load %arg3[%c0_3, %c0_4] : memref<1x128xf32, #tpu.memory_space<vmem>>, vector<1x128xf32>
    %4 = vector.broadcast %3 : vector<1x128xf32> to vector<8x128xf32>
    %5 = arith.addf %2, %4 : vector<8x128xf32>
    %cst_5 = arith.constant 5.000000e-01 : f32
    %6 = vector.broadcast %cst_5 : f32 to vector<8x128xf32>
    %7 = arith.mulf %5, %6 : vector<8x128xf32>
    %cst_6 = arith.constant 0.707106769 : f32
    %8 = vector.broadcast %cst_6 : f32 to vector<8x128xf32>
    %9 = arith.mulf %5, %8 : vector<8x128xf32>
    %10 = math.erf %9 : vector<8x128xf32>
    %cst_7 = arith.constant 1.000000e+00 : f32
    %11 = vector.broadcast %cst_7 : f32 to vector<8x128xf32>
    %12 = arith.addf %11, %10 : vector<8x128xf32>
    %13 = arith.mulf %7, %12 : vector<8x128xf32>
    %c0_8 = arith.constant 0 : index
    %c0_9 = arith.constant 0 : index
    %14 = vector.load %arg4[%c0_8, %c0_9] : memref<128x128xf32, #tpu.memory_space<vmem>>, vector<128x128xf32>
    %cst_10 = arith.constant dense<0.000000e+00> : vector<8x128xf32>
    %15 = tpu.matmul %13, %14, %cst_10 {dimension_numbers = #tpu.dot_dimension_numbers<[1], [0], [0], [1], [0, 0, 1, 1], [], []>} : vector<8x128xf32>, vector<128x128xf32>, vector<8x128xf32> -> vector<8x128xf32>
    %c0_11 = arith.constant 0 : index
    %c0_12 = arith.constant 0 : index
    %16 = vector.load %arg5[%c0_11, %c0_12] : memref<1x128xf32, #tpu.memory_space<vmem>>, vector<1x128xf32>
    %17 = vector.broadcast %16 : vector<1x128xf32> to vector<8x128xf32>
    %18 = arith.addf %15, %17 : vector<8x128xf32>
    %cst_13 = arith.constant 5.000000e-01 : f32
    %19 = vector.broadcast %cst_13 : f32 to vector<8x128xf32>
    %20 = arith.mulf %18, %19 : vector<8x128xf32>
    %cst_14 = arith.constant 0.707106769 : f32
    %21 = vector.broadcast %cst_14 : f32 to vector<8x128xf32>
    %22 = arith.mulf %18, %21 : vector<8x128xf32>
    %23 = math.erf %22 : vector<8x128xf32>
    %cst_15 = arith.constant 1.000000e+00 : f32
    %24 = vector.broadcast %cst_15 : f32 to vector<8x128xf32>
    %25 = arith.addf %24, %23 : vector<8x128xf32>
    %26 = arith.mulf %20, %25 : vector<8x128xf32>
    %c0_16 = arith.constant 0 : index
    %c0_17 = arith.constant 0 : index
    %27 = vector.load %arg6[%c0_16, %c0_17] : memref<8x128xf32, #tpu.memory_space<vmem>>, vector<8x128xf32>
    tpu.vector_store %arg6[%c0_16, %c0_17], %26 {strides = array<i32>} : memref<8x128xf32, #tpu.memory_space<vmem>>, vector<8x128xf32>,
    return
  }
  func.func @transform_0(%arg0: i32) -> (i32, i32) {
    %c0_i32 = arith.constant 0 : i32
    %c0_i32_0 = arith.constant 0 : i32
    return %arg0, %c0_i32 : i32, i32
  }
  func.func @transform_1(%arg0: i32) -> (i32, i32) {
    %c0_i32 = arith.constant 0 : i32
    %c0_i32_0 = arith.constant 0 : i32
    %c0_i32_1 = arith.constant 0 : i32
    return %c0_i32, %c0_i32_0 : i32, i32
  }
  func.func @transform_2(%arg0: i32) -> (i32, i32) {
    %c0_i32 = arith.constant 0 : i32
    %c0_i32_0 = arith.constant 0 : i32
    %c0_i32_1 = arith.constant 0 : i32
    return %c0_i32, %c0_i32_0 : i32, i32
  }
  func.func @transform_3(%arg0: i32) -> (i32, i32) {
    %c0_i32 = arith.constant 0 : i32
    %c0_i32_0 = arith.constant 0 : i32
    %c0_i32_1 = arith.constant 0 : i32
    return %c0_i32, %c0_i32_0 : i32, i32
  }
  func.func @transform_4(%arg0: i32) -> (i32, i32) {
    %c0_i32 = arith.constant 0 : i32
    %c0_i32_0 = arith.constant 0 : i32
    %c0_i32_1 = arith.constant 0 : i32
    return %c0_i32, %c0_i32_0 : i32, i32
  }
  func.func @transform_5(%arg0: i32) -> (i32, i32) {
    %c0_i32 = arith.constant 0 : i32
    %c0_i32_0 = arith.constant 0 : i32
    return %arg0, %c0_i32 : i32, i32
  }
}

module attributes {stable_mosaic.version = 11 : i64} {
  func.func @kernel(%arg0: i32, %arg1: memref<8x128xf32, #tpu.memory_space<vmem>>, %arg2: memref<128x128xf32, #tpu.memory_space<vmem>>, %arg3: memref<1x128xf32, #tpu.memory_space<vmem>>, %arg4: memref<128x128xf32, #tpu.memory_space<vmem>>, %arg5: memref<1x128xf32, #tpu.memory_space<vmem>>, %arg6: memref<8x128xf32, #tpu.memory_space<vmem>>) attributes {dimension_semantics = [#tpu.dimension_semantics<parallel>], iteration_bounds = array<i64: 2>, scalar_prefetch = 0 : i64, scratch_operands = 0 : i64, tpu.core_type = #tpu.core_type<tc>, window_params = [{transform_indices = @transform_0, window_bounds = array<i64: 8, 128>}, {pipeline_mode = #tpu.pipeline_mode<synchronous>, transform_indices = @transform_1, window_bounds = array<i64: 128, 128>}, {pipeline_mode = #tpu.pipeline_mode<synchronous>, transform_indices = @transform_2, window_bounds = array<i64: 1, 128>}, {pipeline_mode = #tpu.pipeline_mode<synchronous>, transform_indices = @transform_3, window_bounds = array<i64: 128, 128>}, {pipeline_mode = #tpu.pipeline_mode<synchronous>, transform_indices = @transform_4, window_bounds = array<i64: 1, 128>}, {transform_indices = @transform_5, window_bounds = array<i64: 8, 128>}]} {
    %c0 = arith.constant 0 : index
    %c0_0 = arith.constant 0 : index
    %0 = vector.load %arg1[%c0, %c0_0] : memref<8x128xf32, #tpu.memory_space<vmem>>, vector<8x128xf32>
    %c0_1 = arith.constant 0 : index
    %c0_2 = arith.constant 0 : index
    %1 = vector.load %arg2[%c0_1, %c0_2] : memref<128x128xf32, #tpu.memory_space<vmem>>, vector<128x128xf32>
    %cst = arith.constant dense<0.000000e+00> : vector<8x128xf32>
    %2 = tpu.matmul %0, %1, %cst {dimension_numbers = #tpu.dot_dimension_numbers<[1], [0], [0], [1], [0, 0, 1, 1], [], []>} : vector<8x128xf32>, vector<128x128xf32>, vector<8x128xf32> -> vector<8x128xf32>
    %c0_3 = arith.constant 0 : index
    %c0_4 = arith.constant 0 : index
    %3 = vector.load %arg3[%c0_3, %c0_4] : memref<1x128xf32, #tpu.memory_space<vmem>>, vector<1x128xf32>
    %4 = vector.broadcast %3 : vector<1x128xf32> to vector<8x128xf32>
    %5 = arith.addf %2, %4 : vector<8x128xf32>
    %cst_5 = arith.constant 5.000000e-01 : f32
    %6 = vector.broadcast %cst_5 : f32 to vector<8x128xf32>
    %7 = arith.mulf %5, %6 : vector<8x128xf32>
    %cst_6 = arith.constant 0.707106769 : f32
    %8 = vector.broadcast %cst_6 : f32 to vector<8x128xf32>
    %9 = arith.mulf %5, %8 : vector<8x128xf32>
    %10 = math.erf %9 : vector<8x128xf32>
    %cst_7 = arith.constant 1.000000e+00 : f32
    %11 = vector.broadcast %cst_7 : f32 to vector<8x128xf32>
    %12 = arith.addf %11, %10 : vector<8x128xf32>
    %13 = arith.mulf %7, %12 : vector<8x128xf32>
    %c0_8 = arith.constant 0 : index
    %c0_9 = arith.constant 0 : index
    %14 = vector.load %arg4[%c0_8, %c0_9] : memref<128x128xf32, #tpu.memory_space<vmem>>, vector<128x128xf32>
    %cst_10 = arith.constant dense<0.000000e+00> : vector<8x128xf32>
    %15 = tpu.matmul %13, %14, %cst_10 {dimension_numbers = #tpu.dot_dimension_numbers<[1], [0], [0], [1], [0, 0, 1, 1], [], []>} : vector<8x128xf32>, vector<128x128xf32>, vector<8x128xf32> -> vector<8x128xf32>
    %c0_11 = arith.constant 0 : index
    %c0_12 = arith.constant 0 : index
    %16 = vector.load %arg5[%c0_11, %c0_12] : memref<1x128xf32, #tpu.memory_space<vmem>>, vector<1x128xf32>
    %17 = vector.broadcast %16 : vector<1x128xf32> to vector<8x128xf32>
    %18 = arith.addf %15, %17 : vector<8x128xf32>
    %cst_13 = arith.constant 5.000000e-01 : f32
    %19 = vector.broadcast %cst_13 : f32 to vector<8x128xf32>
    %20 = arith.mulf %18, %19 : vector<8x128xf32>
    %cst_14 = arith.constant 0.707106769 : f32
    %21 = vector.broadcast %cst_14 : f32 to vector<8x128xf32>
    %22 = arith.mulf %18, %21 : vector<8x128xf32>
    %23 = math.erf %22 : vector<8x128xf32>
    %cst_15 = arith.constant 1.000000e+00 : f32
    %24 = vector.broadcast %cst_15 : f32 to vector<8x128xf32>
    %25 = arith.addf %24, %23 : vector<8x128xf32>
    %26 = arith.mulf %20, %25 : vector<8x128xf32>
    %c0_16 = arith.constant 0 : index
    %c0_17 = arith.constant 0 : index
    %27 = vector.load %arg6[%c0_16, %c0_17] : memref<8x128xf32, #tpu.memory_space<vmem>>, vector<8x128xf32>
    tpu.vector_store %arg6[%c0_16, %c0_17], %26 {strides = array<i32>} : memref<8x128xf32, #tpu.memory_space<vmem>>, vector<8x128xf32>,
    return
  }
  func.func @transform_0(%arg0: i32) -> (i32, i32) {
    %c0_i32 = arith.constant 0 : i32
    %c0_i32_0 = arith.constant 0 : i32
    return %arg0, %c0_i32 : i32, i32
  }
  func.func @transform_1(%arg0: i32) -> (i32, i32) {
    %c0_i32 = arith.constant 0 : i32
    %c0_i32_0 = arith.constant 0 : i32
    %c0_i32_1 = arith.constant 0 : i32
    return %c0_i32, %c0_i32_0 : i32, i32
  }
  func.func @transform_2(%arg0: i32) -> (i32, i32) {
    %c0_i32 = arith.constant 0 : i32
    %c0_i32_0 = arith.constant 0 : i32
    %c0_i32_1 = arith.constant 0 : i32
    return %c0_i32, %c0_i32_0 : i32, i32
  }
  func.func @transform_3(%arg0: i32) -> (i32, i32) {
    %c0_i32 = arith.constant 0 : i32
    %c0_i32_0 = arith.constant 0 : i32
    %c0_i32_1 = arith.constant 0 : i32
    return %c0_i32, %c0_i32_0 : i32, i32
  }
  func.func @transform_4(%arg0: i32) -> (i32, i32) {
    %c0_i32 = arith.constant 0 : i32
    %c0_i32_0 = arith.constant 0 : i32
    %c0_i32_1 = arith.constant 0 : i32
    return %c0_i32, %c0_i32_0 : i32, i32
  }
  func.func @transform_5(%arg0: i32) -> (i32, i32) {
    %c0_i32 = arith.constant 0 : i32
    %c0_i32_0 = arith.constant 0 : i32
    return %arg0, %c0_i32 : i32, i32
  }
}

</mosaic_0001>

<llo_original>
// kernel: tpu_custom_call.1
$region0: #{tpu_custom_call.1}
  #allocation0 [shape = 'u32[]', space=smem, size = 0x4, offset = 0x4, fixed_abs, tag = 'smem constant byte address 0x4 - core index']
  #allocation1 [shape = 'u32[72,128]{1,0:T(1,128)}', space=vmem, size = 0x9000, scoped, tag = 'internal scratch']
  %s0 = inlined_call_operand.hbm [shape: f32[16,128], index: 0, kind: input, shape index: {}]
  %s1 = inlined_call_operand.hbm [shape: f32[128,128], index: 1, kind: input, shape index: {}]
  %s2 = inlined_call_operand.vmem [shape: f32[1,128], index: 2, kind: input, shape index: {}]
  %s3 = inlined_call_operand.hbm [shape: f32[128,128], index: 3, kind: input, shape index: {}]
  %s4 = inlined_call_operand.vmem [shape: f32[1,128], index: 4, kind: input, shape index: {}]
  %s5 = inlined_call_operand.hbm [shape: f32[16,128], index: 5, kind: output, shape index: {}]
  %s6 = sld [smem:[#allocation0]]
  $region65: #{tpu_custom_call.1} parent=0
    _
  %s8 = ssub.s32 1, %s6
  %s9 = scalar_select 0, %s8, %s6
  $region1: #{tpu_custom_call.1} parent=0
    #allocation2 [shape = 'u8[8192]{0}', space=vmem, size = 0x2000, scoped, tag = 'input window, operand 0']
    #allocation3 [shape = 's32[2]{0}', space=sflag, size = 0x8, scoped, tag = 'scoped memory for tpu_custom_call.1']
    #allocation4 [shape = 's32[2]{0}', space=sflag, size = 0x8, scoped, tag = 'scoped memory for tpu_custom_call.1']
    #allocation5 [shape = 'u8[65536]{0}', space=vmem, size = 0x10000, scoped, tag = 'input window, operand 1, single buffered']
    #allocation6 [shape = 's32[1]{0}', space=sflag, size = 0x4, scoped, tag = 'scoped memory for tpu_custom_call.1']
    #allocation7 [shape = 'u8[65536]{0}', space=vmem, size = 0x10000, scoped, tag = 'input window, operand 3, single buffered']
    #allocation8 [shape = 'u8[8192]{0}', space=vmem, size = 0x2000, scoped, tag = 'output window, operand 0']
    %10 = vsyncpa [#allocation3], 0
    %s11 = scalar_lea.sflag [#allocation3], 1
    %12 = vsyncpa %s11, 0
    %13 = vsyncpa [#allocation6], 0
    %14 = vsyncpa [#allocation4], 0
    %s15 = scalar_lea.sflag [#allocation4], 1
    %16 = vsyncpa %s15, 0
    loop: start=0, step=1, limit=4
    $region2: #{tpu_custom_call.1} parent=1 // loop_pre_header
      _
    $region3: #{tpu_custom_call.1} parent=1 // loop_header
      %s18 = sphi 0, %s22
      %p19 = scmp.ge.s32.totalorder %s18, 4
      %s28 = sphi 0, %s30
      %s31 = sphi 0, %s28
      %s32 = sphi 0, %s31
      %s48 = sphi 0, %s32
      %s52 = sphi 0, %s52
      %s54 = sphi 0, %s52
      %s55 = sphi 0, %s54
      %s69 = sphi 0, %s55
      %s73 = sphi 0, %s73
      %s75 = sphi 0, %s73
      %s76 = sphi 0, %s75
      %s90 = sphi 0, %s76
      %s94 = sphi 0, %s94
      %s96 = sphi 0, %s94
      %s97 = sphi 0, %s96
      %s111 = sphi 0, %s97
      %s115 = sphi 0, %s115
      %s117 = sphi 0, %s115
      %s118 = sphi 0, %s117
      %s132 = sphi 0, %s118
      %s138 = sphi 0, %s140
      %s141 = sphi 0, %s138
      %s142 = sphi 0, %s141
      %s158 = sphi 0, %s142
    $region4: #{tpu_custom_call.1} parent=1 // loop_header_branch
      %21 = sbr.rel (%p19) target = $region8
    $region5: #{tpu_custom_call.1} parent=1 // loop_body
      %s23 = ssub.s32 %s18, 1
      %s24 = ssub.s32 %s18, 2
      %s25 = sadd.s32 %s18, 1
      %s26 = ssub.s32 %s18, %s25
      %p27 = scmp.eq.s32.totalorder %s26, 0
      %s29 = sadd.s32 %s28, 1
      %s30 = scalar_select %p27, %s28, %s29
      %p33 = pneg %p27
      %p34 = scmp.eq.s32.totalorder %s18, 1
      %p35 = por %p33, %p34
      %p36 = scmp.ne.s32.totalorder %s28, %s31
      %p37 = scmp.eq.s32.totalorder %s18, 0
      %p38 = por %p36, %p37
      %p39 = scmp.ne.s32.totalorder %s28, %s31
      %p40 = scmp.eq.s32.totalorder %s23, 1
      %p41 = por %p39, %p40
      %p42 = scmp.ne.s32.totalorder %s31, %s32
      %p43 = scmp.eq.s32.totalorder %s23, 0
      %p44 = por %p42, %p43
      %p45 = scmp.ne.s32.totalorder %s31, %s32
      %p46 = scmp.eq.s32.totalorder %s24, 1
      %p47 = por %p45, %p46
      %p49 = scmp.ne.s32.totalorder %s32, %s48
      %p50 = scmp.eq.s32.totalorder %s24, 0
      %p51 = por %p49, %p50
      %s53 = sadd.s32 %s52, 1
      %p56 = scmp.eq.s32.totalorder %s18, 1
      %p57 = scmp.ne.s32.totalorder %s52, %s54
      %p58 = scmp.eq.s32.totalorder %s18, 0
      %p59 = por %p57, %p58
      %p60 = scmp.ne.s32.totalorder %s52, %s54
      %p61 = scmp.eq.s32.totalorder %s23, 1
      %p62 = por %p60, %p61
      %p63 = scmp.ne.s32.totalorder %s54, %s55
      %p64 = scmp.eq.s32.totalorder %s23, 0
      %p65 = por %p63, %p64
      %p66 = scmp.ne.s32.totalorder %s54, %s55
      %p67 = scmp.eq.s32.totalorder %s24, 1
      %p68 = por %p66, %p67
      %p70 = scmp.ne.s32.totalorder %s55, %s69
      %p71 = scmp.eq.s32.totalorder %s24, 0
      %p72 = por %p70, %p71
      %s74 = sadd.s32 %s73, 1
      %p77 = scmp.eq.s32.totalorder %s18, 1
      %p78 = scmp.ne.s32.totalorder %s73, %s75
      %p79 = scmp.eq.s32.totalorder %s18, 0
      %p80 = por %p78, %p79
      %p81 = scmp.ne.s32.totalorder %s73, %s75
      %p82 = scmp.eq.s32.totalorder %s23, 1
      %p83 = por %p81, %p82
      %p84 = scmp.ne.s32.totalorder %s75, %s76
      %p85 = scmp.eq.s32.totalorder %s23, 0
      %p86 = por %p84, %p85
      %p87 = scmp.ne.s32.totalorder %s75, %s76
      %p88 = scmp.eq.s32.totalorder %s24, 1
      %p89 = por %p87, %p88
      %p91 = scmp.ne.s32.totalorder %s76, %s90
      %p92 = scmp.eq.s32.totalorder %s24, 0
      %p93 = por %p91, %p92
      %s95 = sadd.s32 %s94, 1
      %p98 = scmp.eq.s32.totalorder %s18, 1
      %p99 = scmp.ne.s32.totalorder %s94, %s96
      %p100 = scmp.eq.s32.totalorder %s18, 0
      %p101 = por %p99, %p100
      %p102 = scmp.ne.s32.totalorder %s94, %s96
      %p103 = scmp.eq.s32.totalorder %s23, 1
      %p104 = por %p102, %p103
      %p105 = scmp.ne.s32.totalorder %s96, %s97
      %p106 = scmp.eq.s32.totalorder %s23, 0
      %p107 = por %p105, %p106
      %p108 = scmp.ne.s32.totalorder %s96, %s97
      %p109 = scmp.eq.s32.totalorder %s24, 1
      %p110 = por %p108, %p109
      %p112 = scmp.ne.s32.totalorder %s97, %s111
      %p113 = scmp.eq.s32.totalorder %s24, 0
      %p114 = por %p112, %p113
      %s116 = sadd.s32 %s115, 1
      %p119 = scmp.eq.s32.totalorder %s18, 1
      %p120 = scmp.ne.s32.totalorder %s115, %s117
      %p121 = scmp.eq.s32.totalorder %s18, 0
      %p122 = por %p120, %p121
      %p123 = scmp.ne.s32.totalorder %s115, %s117
      %p124 = scmp.eq.s32.totalorder %s23, 1
      %p125 = por %p123, %p124
      %p126 = scmp.ne.s32.totalorder %s117, %s118
      %p127 = scmp.eq.s32.totalorder %s23, 0
      %p128 = por %p126, %p127
      %p129 = scmp.ne.s32.totalorder %s117, %s118
      %p130 = scmp.eq.s32.totalorder %s24, 1
      %p131 = por %p129, %p130
      %p133 = scmp.ne.s32.totalorder %s118, %s132
      %p134 = scmp.eq.s32.totalorder %s24, 0
      %p135 = por %p133, %p134
      %s136 = ssub.s32 %s18, %s25
      %p137 = scmp.eq.s32.totalorder %s136, 0
      %s139 = sadd.s32 %s138, 1
      %s140 = scalar_select %p137, %s138, %s139
      %p143 = pneg %p137
      %p144 = scmp.eq.s32.totalorder %s18, 1
      %p145 = por %p143, %p144
      %p146 = scmp.ne.s32.totalorder %s138, %s141
      %p147 = scmp.eq.s32.totalorder %s18, 0
      %p148 = por %p146, %p147
      %p149 = scmp.ne.s32.totalorder %s138, %s141
      %p150 = scmp.eq.s32.totalorder %s23, 1
      %p151 = por %p149, %p150
      %p152 = scmp.ne.s32.totalorder %s141, %s142
      %p153 = scmp.eq.s32.totalorder %s23, 0
      %p154 = por %p152, %p153
      %p155 = scmp.ne.s32.totalorder %s141, %s142
      %p156 = scmp.eq.s32.totalorder %s24, 1
      %p157 = por %p155, %p156
      %p159 = scmp.ne.s32.totalorder %s142, %s158
      %p160 = scmp.eq.s32.totalorder %s24, 0
      %p161 = por %p159, %p160
      %p162 = scmp.le.s32.totalorder 1, %s18
      %p163 = scmp.lt.s32.totalorder %s18, 3
      %p164 = pnand %p162, %p163
      %p165 = pneg %p164
      // Predicated region
      $region9: #{tpu_custom_call.1} parent=5 // pred_check
        _
      $region10: #{tpu_custom_call.1} parent=5 // pred_check_branch
        %167 = sbr.rel (%p164) target = $region12
      $region11: #{tpu_custom_call.1} parent=5 // pred_region
        %s168 = ssub.s32 %s18, 1
        // Predicated region
        $region13: #{tpu_custom_call.1} parent=11 // pred_check
          %p169 = pneg %p65
        $region14: #{tpu_custom_call.1} parent=11 // pred_check_branch
          %171 = sbr.rel (%p169) target = $region16
        $region15: #{tpu_custom_call.1} parent=11 // pred_region
          %173 = vsyncadd [#allocation6], 0
          %s174 = sshll.u32 %s1, 4
          %s175 = int_to_ptr.hbm [resolvable:$true] %s174
          %s176 = sshll.u32 [#allocation5], 4
          %s177 = int_to_ptr.vmem [resolvable:$true] %s176
          %182 = dma.hbm_to_vmem [thread:$0]  %s175, 2048, %s177, [#allocation6], 128, 128, 8
        $region16: #{tpu_custom_call.1} parent=11 // pred_fallthru
          _
        // Predicated region
        $region17: #{tpu_custom_call.1} parent=11 // pred_check
          %p183 = pneg %p86
        $region18: #{tpu_custom_call.1} parent=11 // pred_check_branch
          %185 = sbr.rel (%p183) target = $region20
        $region19: #{tpu_custom_call.1} parent=11 // pred_region
          _
        $region20: #{tpu_custom_call.1} parent=11 // pred_fallthru
          _
        // Predicated region
        $region21: #{tpu_custom_call.1} parent=11 // pred_check
          %p186 = pneg %p107
        $region22: #{tpu_custom_call.1} parent=11 // pred_check_branch
          %188 = sbr.rel (%p186) target = $region24
        $region23: #{tpu_custom_call.1} parent=11 // pred_region
          %190 = vsyncadd [#allocation6], 0
          %s191 = sshll.u32 %s3, 4
          %s192 = int_to_ptr.hbm [resolvable:$true] %s191
          %s193 = sshll.u32 [#allocation7], 4
          %s194 = int_to_ptr.vmem [resolvable:$true] %s193
          %199 = dma.hbm_to_vmem [thread:$0]  %s192, 2048, %s194, [#allocation6], 128, 128, 8
        $region24: #{tpu_custom_call.1} parent=11 // pred_fallthru
          _
        // Predicated region
        $region25: #{tpu_custom_call.1} parent=11 // pred_check
          %p200 = pneg %p128
        $region26: #{tpu_custom_call.1} parent=11 // pred_check_branch
          %202 = sbr.rel (%p200) target = $region28
        $region27: #{tpu_custom_call.1} parent=11 // pred_region
          _
        $region28: #{tpu_custom_call.1} parent=11 // pred_fallthru
          _
      $region12: #{tpu_custom_call.1} parent=5 // pred_fallthru
        _
      %p203 = scmp.lt.s32.totalorder %s18, 2
      // Predicated region
      $region29: #{tpu_custom_call.1} parent=5 // pred_check
        %p204 = pneg %p203
      $region30: #{tpu_custom_call.1} parent=5 // pred_check_branch
        %206 = sbr.rel (%p204) target = $region32
      $region31: #{tpu_custom_call.1} parent=5 // pred_region
        // Predicated region
        $region33: #{tpu_custom_call.1} parent=31 // pred_check
          %p207 = pneg %p38
        $region34: #{tpu_custom_call.1} parent=31 // pred_check_branch
          %209 = sbr.rel (%p207) target = $region36
        $region35: #{tpu_custom_call.1} parent=31 // pred_region
          %s210 = sand.u32 %s28, 1
          %s211 = scalar_lea.sflag [#allocation3], %s210
          %s212 = sand.u32 %s28, 1
          %s213 = smul.addr %s212, 8
          %s214 = scalar_lea.vmem [#allocation2], %s213
          %216 = vsyncadd %s211, 0
          %s217 = smul.addr %s18, 8
          %s218 = scalar_lea.hbm %s0, %s217
          %s220 = sshll.u32 %s218, 4
          %s221 = int_to_ptr.hbm [resolvable:$true] %s220
          %s222 = sshll.u32 %s214, 4
          %s223 = int_to_ptr.vmem [resolvable:$true] %s222
          %225 = dma.hbm_to_vmem [thread:$0]  %s221, 128, %s223, %s211
        $region36: #{tpu_custom_call.1} parent=31 // pred_fallthru
          _
      $region32: #{tpu_custom_call.1} parent=5 // pred_fallthru
        _
      %p226 = scmp.le.s32.totalorder 1, %s18
      %p227 = scmp.lt.s32.totalorder %s18, 3
      %p228 = pnand %p226, %p227
      %p229 = pneg %p228
      // Predicated region
      $region37: #{tpu_custom_call.1} parent=5 // pred_check
        _
      $region38: #{tpu_custom_call.1} parent=5 // pred_check_branch
        %231 = sbr.rel (%p228) target = $region40
      $region39: #{tpu_custom_call.1} parent=5 // pred_region
        %s232 = ssub.s32 %s18, 1
        %s233 = sand.u32 %s31, 1
        %s234 = scalar_lea.sflag [#allocation3], %s233
        %s235 = sand.u32 %s31, 1
        %s236 = smul.addr %s235, 8
        %s237 = scalar_lea.vmem [#allocation2], %s236
        // Predicated region
        $region41: #{tpu_custom_call.1} parent=39 // pred_check
          %p238 = pneg %p44
        $region42: #{tpu_custom_call.1} parent=39 // pred_check_branch
          %240 = sbr.rel (%p238) target = $region44
        $region43: #{tpu_custom_call.1} parent=39 // pred_region
          %242 = dma.done %s234, 128
        $region44: #{tpu_custom_call.1} parent=39 // pred_fallthru
          _
        // Predicated region
        $region45: #{tpu_custom_call.1} parent=39 // pred_check
          %p243 = pneg %p65
        $region46: #{tpu_custom_call.1} parent=39 // pred_check_branch
          %245 = sbr.rel (%p243) target = $region48
        $region47: #{tpu_custom_call.1} parent=39 // pred_region
          %247 = dma.done [#allocation6], 2048
        $region48: #{tpu_custom_call.1} parent=39 // pred_fallthru
          _
        // Predicated region
        $region49: #{tpu_custom_call.1} parent=39 // pred_check
          %p248 = pneg %p107
        $region50: #{tpu_custom_call.1} parent=39 // pred_check_branch
          %250 = sbr.rel (%p248) target = $region52
        $region51: #{tpu_custom_call.1} parent=39 // pred_region
          %252 = dma.done [#allocation6], 2048
        $region52: #{tpu_custom_call.1} parent=39 // pred_fallthru
          _
        %s253 = sand.u32 %s31, 1
        %s254 = scalar_lea.sflag [#allocation3], %s253
        %s255 = sand.u32 %s31, 1
        %s256 = smul.addr %s255, 8
        %s257 = scalar_lea.vmem [#allocation2], %s256
        %p258 = pneg %p44
        %p259 = pneg %p41
        %p260 = pneg %p65
        %p261 = pneg %p62
        %p262 = pneg %p86
        %p263 = pneg %p83
        %p264 = pneg %p107
        %p265 = pneg %p104
        %p266 = pneg %p128
        %p267 = pneg %p125
        %p268 = pneg %p154
        %p269 = pneg %p151
        %s270 = sand.u32 %s141, 1
        %s271 = scalar_lea.sflag [#allocation4], %s270
        %s272 = sand.u32 %s141, 1
        %s273 = smul.addr %s272, 8
        %s274 = scalar_lea.vmem [#allocation8], %s273
        %v275 = vld [vmem:[%s237] sm:$0xff]
        %v276 = vld [vmem:[#allocation5] sm:$0xff]
        %v277 = vld [vmem:[#allocation5 + $0x8] sm:$0xff]
        %v278 = vld [vmem:[#allocation5 + $0x10] sm:$0xff]
        %v279 = vld [vmem:[#allocation5 + $0x18] sm:$0xff]
        %v280 = vld [vmem:[#allocation5 + $0x20] sm:$0xff]
        %v281 = vld [vmem:[#allocation5 + $0x28] sm:$0xff]
        %v282 = vld [vmem:[#allocation5 + $0x30] sm:$0xff]
        %v283 = vld [vmem:[#allocation5 + $0x38] sm:$0xff]
        %v284 = vld [vmem:[#allocation5 + $0x40] sm:$0xff]
        %v285 = vld [vmem:[#allocation5 + $0x48] sm:$0xff]
        %v286 = vld [vmem:[#allocation5 + $0x50] sm:$0xff]
        %v287 = vld [vmem:[#allocation5 + $0x58] sm:$0xff]
        %v288 = vld [vmem:[#allocation5 + $0x60] sm:$0xff]
        %v289 = vld [vmem:[#allocation5 + $0x68] sm:$0xff]
        %v290 = vld [vmem:[#allocation5 + $0x70] sm:$0xff]
        %v291 = vld [vmem:[#allocation5 + $0x78] sm:$0xff]
        %v292 = vld [vmem:[%s2] sm:$0x1]
        %v294 = vperm.slane %v292, 0
        %296 = vmatpush.msra.mxu0 %v291
        %297 = vmatpush.msra.mxu0 %v290
        %298 = vmatpush.msra.mxu0 %v289
        %299 = vmatpush.msra.mxu0 %v288
        %300 = vmatpush.msra.mxu0 %v287
        %301 = vmatpush.msra.mxu0 %v286
        %302 = vmatpush.msra.mxu0 %v285
        %303 = vmatpush.msra.mxu0 %v284
        %304 = vmatpush.msra.mxu0 %v283
        %305 = vmatpush.msra.mxu0 %v282
        %306 = vmatpush.msra.mxu0 %v281
        %307 = vmatpush.msra.mxu0 %v280
        %308 = vmatpush.msra.mxu0 %v279
        %309 = vmatpush.msra.mxu0 %v278
        %310 = vmatpush.msra.mxu0 %v277
        %311 = vmatpush.msra.mxu0 %v276
        %312 = vmatmul.f32.gmra.mxu0 %v275
        %v313 = vpop.f32.mrf.mxu0
        %v314 = vadd.f32 %v294, %v313
        %315 = vdwg.mxu0
        %v316 = vmul.f32 %v314, 0.5
        %v317 = vmul.f32 %v314, 0.70710677
        %v318 = vmul.f32 %v317, %v317
        %v319 = vmin.f32 16.0, %v318
        %v320 = vmul.f32 %v319, 2.1237322e-06
        %v321 = vadd.f32 %v320, 0.00028619796
        %v322 = vmul.f32 %v319, %v321
        %v323 = vadd.f32 %v322, 0.0036580483
        %v324 = vmul.f32 %v319, %v323
        %v325 = vadd.f32 %v324, 0.05243302
        %v326 = vmul.f32 %v319, %v325
        %v327 = vadd.f32 %v326, 0.18741608
        %v328 = vmul.f32 %v319, %v327
        %v329 = vadd.f32 %v328, 1.1283791
        %v330 = vmul.f32 %v317, %v329
        %v331 = vmul.f32 %v319, 3.8918573e-05
        %v332 = vadd.f32 %v331, 0.001143296
        %v333 = vmul.f32 %v319, %v332
        %v334 = vadd.f32 %v333, 0.014752088
        %v335 = vmul.f32 %v319, %v334
        %v336 = vadd.f32 %v335, 0.112945676
        %v337 = vmul.f32 %v319, %v336
        %v338 = vadd.f32 %v337, 0.4994258
        %v339 = vmul.f32 %v319, %v338
        %v340 = vadd.f32 %v339, 1.0
        %v341 = vrcp.pop %v340
        %v342 = vmul.f32 %v340, %v341
        %v343 = vsub.f32 1.0, %v342
        %v344 = vmul.f32 %v341, %v343
        %v345 = vadd.f32 %v341, %v344
        %vm346 = vweird.f32 %v340
        %vm347 = vweird.f32 %v341
        %vm348 = vmor %vm346, %vm347
        %v349 = vsel %vm348, %v341, %v345
        %v350 = vand.u32 2147483647, %v340
        %vm351 = vcmp.eq.f32.partialorder %v350, 8.507059e+37
        %v352 = vand.u32 %v340, 2147483648
        %v353 = vor.u32 1.1754944e-38, %v352
        %v354 = vsel %vm351, %v353, %v349
        %v355 = vmul.f32 %v330, %v354
        %v356 = vmin.f32 %v355, 1.0
        %v357 = vmax.f32 %v356, -1.0
        %v358 = vadd.f32 %v357, 1.0
        %v359 = vmul.f32 %v316, %v358
        %v360 = vld [vmem:[#allocation7] sm:$0xff]
        %v361 = vld [vmem:[#allocation7 + $0x8] sm:$0xff]
        %v362 = vld [vmem:[#allocation7 + $0x10] sm:$0xff]
        %v363 = vld [vmem:[#allocation7 + $0x18] sm:$0xff]
        %v364 = vld [vmem:[#allocation7 + $0x20] sm:$0xff]
        %v365 = vld [vmem:[#allocation7 + $0x28] sm:$0xff]
        %v366 = vld [vmem:[#allocation7 + $0x30] sm:$0xff]
        %v367 = vld [vmem:[#allocation7 + $0x38] sm:$0xff]
        %v368 = vld [vmem:[#allocation7 + $0x40] sm:$0xff]
        %v369 = vld [vmem:[#allocation7 + $0x48] sm:$0xff]
        %v370 = vld [vmem:[#allocation7 + $0x50] sm:$0xff]
        %v371 = vld [vmem:[#allocation7 + $0x58] sm:$0xff]
        %v372 = vld [vmem:[#allocation7 + $0x60] sm:$0xff]
        %v373 = vld [vmem:[#allocation7 + $0x68] sm:$0xff]
        %v374 = vld [vmem:[#allocation7 + $0x70] sm:$0xff]
        %v375 = vld [vmem:[#allocation7 + $0x78] sm:$0xff]
        %v376 = vld [vmem:[%s4] sm:$0x1]
        %v378 = vperm.slane %v376, 0
        %380 = vmatpush.msra.mxu0 %v375
        %381 = vmatpush.msra.mxu0 %v374
        %382 = vmatpush.msra.mxu0 %v373
        %383 = vmatpush.msra.mxu0 %v372
        %384 = vmatpush.msra.mxu0 %v371
        %385 = vmatpush.msra.mxu0 %v370
        %386 = vmatpush.msra.mxu0 %v369
        %387 = vmatpush.msra.mxu0 %v368
        %388 = vmatpush.msra.mxu0 %v367
        %389 = vmatpush.msra.mxu0 %v366
        %390 = vmatpush.msra.mxu0 %v365
        %391 = vmatpush.msra.mxu0 %v364
        %392 = vmatpush.msra.mxu0 %v363
        %393 = vmatpush.msra.mxu0 %v362
        %394 = vmatpush.msra.mxu0 %v361
        %395 = vmatpush.msra.mxu0 %v360
        %396 = vmatmul.f32.gmra.mxu0 %v359
        %v397 = vpop.f32.mrf.mxu0
        %v398 = vadd.f32 %v378, %v397
        %399 = vdwg.mxu0
        %v400 = vmul.f32 %v398, 0.5
        %v401 = vmul.f32 %v398, 0.70710677
        %v402 = vmul.f32 %v401, %v401
        %v403 = vmin.f32 16.0, %v402
        %v404 = vmul.f32 %v403, 2.1237322e-06
        %v405 = vadd.f32 %v404, 0.00028619796
        %v406 = vmul.f32 %v403, %v405
        %v407 = vadd.f32 %v406, 0.0036580483
        %v408 = vmul.f32 %v403, %v407
        %v409 = vadd.f32 %v408, 0.05243302
        %v410 = vmul.f32 %v403, %v409
        %v411 = vadd.f32 %v410, 0.18741608
        %v412 = vmul.f32 %v403, %v411
        %v413 = vadd.f32 %v412, 1.1283791
        %v414 = vmul.f32 %v401, %v413
        %v415 = vmul.f32 %v403, 3.8918573e-05
        %v416 = vadd.f32 %v415, 0.001143296
        %v417 = vmul.f32 %v403, %v416
        %v418 = vadd.f32 %v417, 0.014752088
        %v419 = vmul.f32 %v403, %v418
        %v420 = vadd.f32 %v419, 0.112945676
        %v421 = vmul.f32 %v403, %v420
        %v422 = vadd.f32 %v421, 0.4994258
        %v423 = vmul.f32 %v403, %v422
        %v424 = vadd.f32 %v423, 1.0
        %v425 = vrcp.pop %v424
        %v426 = vmul.f32 %v424, %v425
        %v427 = vsub.f32 1.0, %v426
        %v428 = vmul.f32 %v425, %v427
        %v429 = vadd.f32 %v425, %v428
        %vm430 = vweird.f32 %v424
        %vm431 = vweird.f32 %v425
        %vm432 = vmor %vm430, %vm431
        %v433 = vsel %vm432, %v425, %v429
        %v434 = vand.u32 2147483647, %v424
        %vm435 = vcmp.eq.f32.partialorder %v434, 8.507059e+37
        %v436 = vand.u32 %v424, 2147483648
        %v437 = vor.u32 1.1754944e-38, %v436
        %v438 = vsel %vm435, %v437, %v433
        %v439 = vmul.f32 %v414, %v438
        %v440 = vmin.f32 %v439, 1.0
        %v441 = vmax.f32 %v440, -1.0
        %v442 = vadd.f32 %v441, 1.0
        %v443 = vmul.f32 %v400, %v442
        %444 = vst [vmem:[%s274] sm:$0xff] %v443
        %s445 = sand.u32 %s141, 1
        %s446 = scalar_lea.sflag [#allocation4], %s445
        %s447 = sand.u32 %s141, 1
        %s448 = smul.addr %s447, 8
        %s449 = scalar_lea.vmem [#allocation8], %s448
        // Predicated region
        $region53: #{tpu_custom_call.1} parent=39 // pred_check
          %p450 = pneg %p151
        $region54: #{tpu_custom_call.1} parent=39 // pred_check_branch
          %452 = sbr.rel (%p450) target = $region56
        $region55: #{tpu_custom_call.1} parent=39 // pred_region
          %454 = vsyncadd %s446, 0
          %s455 = smul.addr %s23, 8
          %s456 = scalar_lea.hbm %s5, %s455
          %s458 = sshll.u32 %s449, 4
          %s459 = int_to_ptr.vmem [resolvable:$true] %s458
          %s460 = sshll.u32 %s456, 4
          %s461 = int_to_ptr.hbm [resolvable:$true] %s460
          %463 = dma.vmem_to_hbm [thread:$0]  %s459, 128, %s461, %s446
        $region56: #{tpu_custom_call.1} parent=39 // pred_fallthru
          _
      $region40: #{tpu_custom_call.1} parent=5 // pred_fallthru
        _
      %p464 = scmp.le.s32.totalorder 2, %s18
      // Predicated region
      $region57: #{tpu_custom_call.1} parent=5 // pred_check
        %p465 = pneg %p464
      $region58: #{tpu_custom_call.1} parent=5 // pred_check_branch
        %467 = sbr.rel (%p465) target = $region60
      $region59: #{tpu_custom_call.1} parent=5 // pred_region
        %s468 = ssub.s32 %s18, 2
        // Predicated region
        $region61: #{tpu_custom_call.1} parent=59 // pred_check
          %p469 = pneg %p157
        $region62: #{tpu_custom_call.1} parent=59 // pred_check_branch
          %471 = sbr.rel (%p469) target = $region64
        $region63: #{tpu_custom_call.1} parent=59 // pred_region
          %s472 = sand.u32 %s142, 1
          %s473 = scalar_lea.sflag [#allocation4], %s472
          %s474 = sand.u32 %s142, 1
          %s475 = smul.addr %s474, 8
          %s476 = scalar_lea.vmem [#allocation8], %s475
          %478 = dma.done %s473, 128
        $region64: #{tpu_custom_call.1} parent=59 // pred_fallthru
          _
      $region60: #{tpu_custom_call.1} parent=5 // pred_fallthru
        _
    $region6: #{tpu_custom_call.1} parent=1 // loop_footer
      %s22 = sadd.s32 1, %s18
    $region7: #{tpu_custom_call.1} parent=1 // loop_footer_branch
      %17 = sbr.rel target = $region3
    $region8: #{tpu_custom_call.1} parent=1 // loop_exit
      _
    %479 = vsyncpa [#allocation3], 1
    %s480 = scalar_lea.sflag [#allocation3], 1
    %481 = vsyncpa %s480, 1
    %482 = vsyncpa [#allocation6], 1
    %483 = vsyncpa [#allocation4], 1
    %s484 = scalar_lea.sflag [#allocation4], 1
    %485 = vsyncpa %s484, 1

// kernel: tpu_custom_call.1
$region0: #{tpu_custom_call.1}
  #allocation0 [shape = 'u32[]', space=smem, size = 0x4, offset = 0x4, fixed_abs, tag = 'smem constant byte address 0x4 - core index']
  #allocation1 [shape = 'u32[72,128]{1,0:T(1,128)}', space=vmem, size = 0x9000, scoped, tag = 'internal scratch']
  %s0 = inlined_call_operand.hbm [shape: f32[16,128], index: 0, kind: input, shape index: {}]
  %s1 = inlined_call_operand.hbm [shape: f32[128,128], index: 1, kind: input, shape index: {}]
  %s2 = inlined_call_operand.vmem [shape: f32[1,128], index: 2, kind: input, shape index: {}]
  %s3 = inlined_call_operand.hbm [shape: f32[128,128], index: 3, kind: input, shape index: {}]
  %s4 = inlined_call_operand.vmem [shape: f32[1,128], index: 4, kind: input, shape index: {}]
  %s5 = inlined_call_operand.hbm [shape: f32[16,128], index: 5, kind: output, shape index: {}]
  %s6 = sld [smem:[#allocation0]]
  $region65: #{tpu_custom_call.1} parent=0
    _
  %s8 = ssub.s32 1, %s6
  %s9 = scalar_select 0, %s8, %s6
  $region1: #{tpu_custom_call.1} parent=0
    #allocation2 [shape = 'u8[8192]{0}', space=vmem, size = 0x2000, scoped, tag = 'input window, operand 0']
    #allocation3 [shape = 's32[2]{0}', space=sflag, size = 0x8, scoped, tag = 'scoped memory for tpu_custom_call.1']
    #allocation4 [shape = 's32[2]{0}', space=sflag, size = 0x8, scoped, tag = 'scoped memory for tpu_custom_call.1']
    #allocation5 [shape = 'u8[65536]{0}', space=vmem, size = 0x10000, scoped, tag = 'input window, operand 1, single buffered']
    #allocation6 [shape = 's32[1]{0}', space=sflag, size = 0x4, scoped, tag = 'scoped memory for tpu_custom_call.1']
    #allocation7 [shape = 'u8[65536]{0}', space=vmem, size = 0x10000, scoped, tag = 'input window, operand 3, single buffered']
    #allocation8 [shape = 'u8[8192]{0}', space=vmem, size = 0x2000, scoped, tag = 'output window, operand 0']
    %10 = vsyncpa [#allocation3], 0
    %s11 = scalar_lea.sflag [#allocation3], 1
    %12 = vsyncpa %s11, 0
    %13 = vsyncpa [#allocation6], 0
    %14 = vsyncpa [#allocation4], 0
    %s15 = scalar_lea.sflag [#allocation4], 1
    %16 = vsyncpa %s15, 0
    loop: start=0, step=1, limit=4
    $region2: #{tpu_custom_call.1} parent=1 // loop_pre_header
      _
    $region3: #{tpu_custom_call.1} parent=1 // loop_header
      %s18 = sphi 0, %s22
      %p19 = scmp.ge.s32.totalorder %s18, 4
      %s28 = sphi 0, %s30
      %s31 = sphi 0, %s28
      %s32 = sphi 0, %s31
      %s48 = sphi 0, %s32
      %s52 = sphi 0, %s52
      %s54 = sphi 0, %s52
      %s55 = sphi 0, %s54
      %s69 = sphi 0, %s55
      %s73 = sphi 0, %s73
      %s75 = sphi 0, %s73
      %s76 = sphi 0, %s75
      %s90 = sphi 0, %s76
      %s94 = sphi 0, %s94
      %s96 = sphi 0, %s94
      %s97 = sphi 0, %s96
      %s111 = sphi 0, %s97
      %s115 = sphi 0, %s115
      %s117 = sphi 0, %s115
      %s118 = sphi 0, %s117
      %s132 = sphi 0, %s118
      %s138 = sphi 0, %s140
      %s141 = sphi 0, %s138
      %s142 = sphi 0, %s141
      %s158 = sphi 0, %s142
    $region4: #{tpu_custom_call.1} parent=1 // loop_header_branch
      %21 = sbr.rel (%p19) target = $region8
    $region5: #{tpu_custom_call.1} parent=1 // loop_body
      %s23 = ssub.s32 %s18, 1
      %s24 = ssub.s32 %s18, 2
      %s25 = sadd.s32 %s18, 1
      %s26 = ssub.s32 %s18, %s25
      %p27 = scmp.eq.s32.totalorder %s26, 0
      %s29 = sadd.s32 %s28, 1
      %s30 = scalar_select %p27, %s28, %s29
      %p33 = pneg %p27
      %p34 = scmp.eq.s32.totalorder %s18, 1
      %p35 = por %p33, %p34
      %p36 = scmp.ne.s32.totalorder %s28, %s31
      %p37 = scmp.eq.s32.totalorder %s18, 0
      %p38 = por %p36, %p37
      %p39 = scmp.ne.s32.totalorder %s28, %s31
      %p40 = scmp.eq.s32.totalorder %s23, 1
      %p41 = por %p39, %p40
      %p42 = scmp.ne.s32.totalorder %s31, %s32
      %p43 = scmp.eq.s32.totalorder %s23, 0
      %p44 = por %p42, %p43
      %p45 = scmp.ne.s32.totalorder %s31, %s32
      %p46 = scmp.eq.s32.totalorder %s24, 1
      %p47 = por %p45, %p46
      %p49 = scmp.ne.s32.totalorder %s32, %s48
      %p50 = scmp.eq.s32.totalorder %s24, 0
      %p51 = por %p49, %p50
      %s53 = sadd.s32 %s52, 1
      %p56 = scmp.eq.s32.totalorder %s18, 1
      %p57 = scmp.ne.s32.totalorder %s52, %s54
      %p58 = scmp.eq.s32.totalorder %s18, 0
      %p59 = por %p57, %p58
      %p60 = scmp.ne.s32.totalorder %s52, %s54
      %p61 = scmp.eq.s32.totalorder %s23, 1
      %p62 = por %p60, %p61
      %p63 = scmp.ne.s32.totalorder %s54, %s55
      %p64 = scmp.eq.s32.totalorder %s23, 0
      %p65 = por %p63, %p64
      %p66 = scmp.ne.s32.totalorder %s54, %s55
      %p67 = scmp.eq.s32.totalorder %s24, 1
      %p68 = por %p66, %p67
      %p70 = scmp.ne.s32.totalorder %s55, %s69
      %p71 = scmp.eq.s32.totalorder %s24, 0
      %p72 = por %p70, %p71
      %s74 = sadd.s32 %s73, 1
      %p77 = scmp.eq.s32.totalorder %s18, 1
      %p78 = scmp.ne.s32.totalorder %s73, %s75
      %p79 = scmp.eq.s32.totalorder %s18, 0
      %p80 = por %p78, %p79
      %p81 = scmp.ne.s32.totalorder %s73, %s75
      %p82 = scmp.eq.s32.totalorder %s23, 1
      %p83 = por %p81, %p82
      %p84 = scmp.ne.s32.totalorder %s75, %s76
      %p85 = scmp.eq.s32.totalorder %s23, 0
      %p86 = por %p84, %p85
      %p87 = scmp.ne.s32.totalorder %s75, %s76
      %p88 = scmp.eq.s32.totalorder %s24, 1
      %p89 = por %p87, %p88
      %p91 = scmp.ne.s32.totalorder %s76, %s90
      %p92 = scmp.eq.s32.totalorder %s24, 0
      %p93 = por %p91, %p92
      %s95 = sadd.s32 %s94, 1
      %p98 = scmp.eq.s32.totalorder %s18, 1
      %p99 = scmp.ne.s32.totalorder %s94, %s96
      %p100 = scmp.eq.s32.totalorder %s18, 0
      %p101 = por %p99, %p100
      %p102 = scmp.ne.s32.totalorder %s94, %s96
      %p103 = scmp.eq.s32.totalorder %s23, 1
      %p104 = por %p102, %p103
      %p105 = scmp.ne.s32.totalorder %s96, %s97
      %p106 = scmp.eq.s32.totalorder %s23, 0
      %p107 = por %p105, %p106
      %p108 = scmp.ne.s32.totalorder %s96, %s97
      %p109 = scmp.eq.s32.totalorder %s24, 1
      %p110 = por %p108, %p109
      %p112 = scmp.ne.s32.totalorder %s97, %s111
      %p113 = scmp.eq.s32.totalorder %s24, 0
      %p114 = por %p112, %p113
      %s116 = sadd.s32 %s115, 1
      %p119 = scmp.eq.s32.totalorder %s18, 1
      %p120 = scmp.ne.s32.totalorder %s115, %s117
      %p121 = scmp.eq.s32.totalorder %s18, 0
      %p122 = por %p120, %p121
      %p123 = scmp.ne.s32.totalorder %s115, %s117
      %p124 = scmp.eq.s32.totalorder %s23, 1
      %p125 = por %p123, %p124
      %p126 = scmp.ne.s32.totalorder %s117, %s118
      %p127 = scmp.eq.s32.totalorder %s23, 0
      %p128 = por %p126, %p127
      %p129 = scmp.ne.s32.totalorder %s117, %s118
      %p130 = scmp.eq.s32.totalorder %s24, 1
      %p131 = por %p129, %p130
      %p133 = scmp.ne.s32.totalorder %s118, %s132
      %p134 = scmp.eq.s32.totalorder %s24, 0
      %p135 = por %p133, %p134
      %s136 = ssub.s32 %s18, %s25
      %p137 = scmp.eq.s32.totalorder %s136, 0
      %s139 = sadd.s32 %s138, 1
      %s140 = scalar_select %p137, %s138, %s139
      %p143 = pneg %p137
      %p144 = scmp.eq.s32.totalorder %s18, 1
      %p145 = por %p143, %p144
      %p146 = scmp.ne.s32.totalorder %s138, %s141
      %p147 = scmp.eq.s32.totalorder %s18, 0
      %p148 = por %p146, %p147
      %p149 = scmp.ne.s32.totalorder %s138, %s141
      %p150 = scmp.eq.s32.totalorder %s23, 1
      %p151 = por %p149, %p150
      %p152 = scmp.ne.s32.totalorder %s141, %s142
      %p153 = scmp.eq.s32.totalorder %s23, 0
      %p154 = por %p152, %p153
      %p155 = scmp.ne.s32.totalorder %s141, %s142
      %p156 = scmp.eq.s32.totalorder %s24, 1
      %p157 = por %p155, %p156
      %p159 = scmp.ne.s32.totalorder %s142, %s158
      %p160 = scmp.eq.s32.totalorder %s24, 0
      %p161 = por %p159, %p160
      %p162 = scmp.le.s32.totalorder 1, %s18
      %p163 = scmp.lt.s32.totalorder %s18, 3
      %p164 = pnand %p162, %p163
      %p165 = pneg %p164
      // Predicated region
      $region9: #{tpu_custom_call.1} parent=5 // pred_check
        _
      $region10: #{tpu_custom_call.1} parent=5 // pred_check_branch
        %167 = sbr.rel (%p164) target = $region12
      $region11: #{tpu_custom_call.1} parent=5 // pred_region
        %s168 = ssub.s32 %s18, 1
        // Predicated region
        $region13: #{tpu_custom_call.1} parent=11 // pred_check
          %p169 = pneg %p65
        $region14: #{tpu_custom_call.1} parent=11 // pred_check_branch
          %171 = sbr.rel (%p169) target = $region16
        $region15: #{tpu_custom_call.1} parent=11 // pred_region
          %173 = vsyncadd [#allocation6], 0
          %s174 = sshll.u32 %s1, 4
          %s175 = int_to_ptr.hbm [resolvable:$true] %s174
          %s176 = sshll.u32 [#allocation5], 4
          %s177 = int_to_ptr.vmem [resolvable:$true] %s176
          %182 = dma.hbm_to_vmem [thread:$0]  %s175, 2048, %s177, [#allocation6], 128, 128, 8
        $region16: #{tpu_custom_call.1} parent=11 // pred_fallthru
          _
        // Predicated region
        $region17: #{tpu_custom_call.1} parent=11 // pred_check
          %p183 = pneg %p86
        $region18: #{tpu_custom_call.1} parent=11 // pred_check_branch
          %185 = sbr.rel (%p183) target = $region20
        $region19: #{tpu_custom_call.1} parent=11 // pred_region
          _
        $region20: #{tpu_custom_call.1} parent=11 // pred_fallthru
          _
        // Predicated region
        $region21: #{tpu_custom_call.1} parent=11 // pred_check
          %p186 = pneg %p107
        $region22: #{tpu_custom_call.1} parent=11 // pred_check_branch
          %188 = sbr.rel (%p186) target = $region24
        $region23: #{tpu_custom_call.1} parent=11 // pred_region
          %190 = vsyncadd [#allocation6], 0
          %s191 = sshll.u32 %s3, 4
          %s192 = int_to_ptr.hbm [resolvable:$true] %s191
          %s193 = sshll.u32 [#allocation7], 4
          %s194 = int_to_ptr.vmem [resolvable:$true] %s193
          %199 = dma.hbm_to_vmem [thread:$0]  %s192, 2048, %s194, [#allocation6], 128, 128, 8
        $region24: #{tpu_custom_call.1} parent=11 // pred_fallthru
          _
        // Predicated region
        $region25: #{tpu_custom_call.1} parent=11 // pred_check
          %p200 = pneg %p128
        $region26: #{tpu_custom_call.1} parent=11 // pred_check_branch
          %202 = sbr.rel (%p200) target = $region28
        $region27: #{tpu_custom_call.1} parent=11 // pred_region
          _
        $region28: #{tpu_custom_call.1} parent=11 // pred_fallthru
          _
      $region12: #{tpu_custom_call.1} parent=5 // pred_fallthru
        _
      %p203 = scmp.lt.s32.totalorder %s18, 2
      // Predicated region
      $region29: #{tpu_custom_call.1} parent=5 // pred_check
        %p204 = pneg %p203
      $region30: #{tpu_custom_call.1} parent=5 // pred_check_branch
        %206 = sbr.rel (%p204) target = $region32
      $region31: #{tpu_custom_call.1} parent=5 // pred_region
        // Predicated region
        $region33: #{tpu_custom_call.1} parent=31 // pred_check
          %p207 = pneg %p38
        $region34: #{tpu_custom_call.1} parent=31 // pred_check_branch
          %209 = sbr.rel (%p207) target = $region36
        $region35: #{tpu_custom_call.1} parent=31 // pred_region
          %s210 = sand.u32 %s28, 1
          %s211 = scalar_lea.sflag [#allocation3], %s210
          %s212 = sand.u32 %s28, 1
          %s213 = smul.addr %s212, 8
          %s214 = scalar_lea.vmem [#allocation2], %s213
          %216 = vsyncadd %s211, 0
          %s217 = smul.addr %s18, 8
          %s218 = scalar_lea.hbm %s0, %s217
          %s220 = sshll.u32 %s218, 4
          %s221 = int_to_ptr.hbm [resolvable:$true] %s220
          %s222 = sshll.u32 %s214, 4
          %s223 = int_to_ptr.vmem [resolvable:$true] %s222
          %225 = dma.hbm_to_vmem [thread:$0]  %s221, 128, %s223, %s211
        $region36: #{tpu_custom_call.1} parent=31 // pred_fallthru
          _
      $region32: #{tpu_custom_call.1} parent=5 // pred_fallthru
        _
      %p226 = scmp.le.s32.totalorder 1, %s18
      %p227 = scmp.lt.s32.totalorder %s18, 3
      %p228 = pnand %p226, %p227
      %p229 = pneg %p228
      // Predicated region
      $region37: #{tpu_custom_call.1} parent=5 // pred_check
        _
      $region38: #{tpu_custom_call.1} parent=5 // pred_check_branch
        %231 = sbr.rel (%p228) target = $region40
      $region39: #{tpu_custom_call.1} parent=5 // pred_region
        %s232 = ssub.s32 %s18, 1
        %s233 = sand.u32 %s31, 1
        %s234 = scalar_lea.sflag [#allocation3], %s233
        %s235 = sand.u32 %s31, 1
        %s236 = smul.addr %s235, 8
        %s237 = scalar_lea.vmem [#allocation2], %s236
        // Predicated region
        $region41: #{tpu_custom_call.1} parent=39 // pred_check
          %p238 = pneg %p44
        $region42: #{tpu_custom_call.1} parent=39 // pred_check_branch
          %240 = sbr.rel (%p238) target = $region44
        $region43: #{tpu_custom_call.1} parent=39 // pred_region
          %242 = dma.done %s234, 128
        $region44: #{tpu_custom_call.1} parent=39 // pred_fallthru
          _
        // Predicated region
        $region45: #{tpu_custom_call.1} parent=39 // pred_check
          %p243 = pneg %p65
        $region46: #{tpu_custom_call.1} parent=39 // pred_check_branch
          %245 = sbr.rel (%p243) target = $region48
        $region47: #{tpu_custom_call.1} parent=39 // pred_region
          %247 = dma.done [#allocation6], 2048
        $region48: #{tpu_custom_call.1} parent=39 // pred_fallthru
          _
        // Predicated region
        $region49: #{tpu_custom_call.1} parent=39 // pred_check
          %p248 = pneg %p107
        $region50: #{tpu_custom_call.1} parent=39 // pred_check_branch
          %250 = sbr.rel (%p248) target = $region52
        $region51: #{tpu_custom_call.1} parent=39 // pred_region
          %252 = dma.done [#allocation6], 2048
        $region52: #{tpu_custom_call.1} parent=39 // pred_fallthru
          _
        %s253 = sand.u32 %s31, 1
        %s254 = scalar_lea.sflag [#allocation3], %s253
        %s255 = sand.u32 %s31, 1
        %s256 = smul.addr %s255, 8
        %s257 = scalar_lea.vmem [#allocation2], %s256
        %p258 = pneg %p44
        %p259 = pneg %p41
        %p260 = pneg %p65
        %p261 = pneg %p62
        %p262 = pneg %p86
        %p263 = pneg %p83
        %p264 = pneg %p107
        %p265 = pneg %p104
        %p266 = pneg %p128
        %p267 = pneg %p125
        %p268 = pneg %p154
        %p269 = pneg %p151
        %s270 = sand.u32 %s141, 1
        %s271 = scalar_lea.sflag [#allocation4], %s270
        %s272 = sand.u32 %s141, 1
        %s273 = smul.addr %s272, 8
        %s274 = scalar_lea.vmem [#allocation8], %s273
        %v275 = vld [vmem:[%s237] sm:$0xff]
        %v276 = vld [vmem:[#allocation5] sm:$0xff]
        %v277 = vld [vmem:[#allocation5 + $0x8] sm:$0xff]
        %v278 = vld [vmem:[#allocation5 + $0x10] sm:$0xff]
        %v279 = vld [vmem:[#allocation5 + $0x18] sm:$0xff]
        %v280 = vld [vmem:[#allocation5 + $0x20] sm:$0xff]
        %v281 = vld [vmem:[#allocation5 + $0x28] sm:$0xff]
        %v282 = vld [vmem:[#allocation5 + $0x30] sm:$0xff]
        %v283 = vld [vmem:[#allocation5 + $0x38] sm:$0xff]
        %v284 = vld [vmem:[#allocation5 + $0x40] sm:$0xff]
        %v285 = vld [vmem:[#allocation5 + $0x48] sm:$0xff]
        %v286 = vld [vmem:[#allocation5 + $0x50] sm:$0xff]
        %v287 = vld [vmem:[#allocation5 + $0x58] sm:$0xff]
        %v288 = vld [vmem:[#allocation5 + $0x60] sm:$0xff]
        %v289 = vld [vmem:[#allocation5 + $0x68] sm:$0xff]
        %v290 = vld [vmem:[#allocation5 + $0x70] sm:$0xff]
        %v291 = vld [vmem:[#allocation5 + $0x78] sm:$0xff]
        %v292 = vld [vmem:[%s2] sm:$0x1]
        %v294 = vperm.slane %v292, 0
        %296 = vmatpush.msra.mxu0 %v291
        %297 = vmatpush.msra.mxu0 %v290
        %298 = vmatpush.msra.mxu0 %v289
        %299 = vmatpush.msra.mxu0 %v288
        %300 = vmatpush.msra.mxu0 %v287
        %301 = vmatpush.msra.mxu0 %v286
        %302 = vmatpush.msra.mxu0 %v285
        %303 = vmatpush.msra.mxu0 %v284
        %304 = vmatpush.msra.mxu0 %v283
        %305 = vmatpush.msra.mxu0 %v282
        %306 = vmatpush.msra.mxu0 %v281
        %307 = vmatpush.msra.mxu0 %v280
        %308 = vmatpush.msra.mxu0 %v279
        %309 = vmatpush.msra.mxu0 %v278
        %310 = vmatpush.msra.mxu0 %v277
        %311 = vmatpush.msra.mxu0 %v276
        %312 = vmatmul.f32.gmra.mxu0 %v275
        %v313 = vpop.f32.mrf.mxu0
        %v314 = vadd.f32 %v294, %v313
        %315 = vdwg.mxu0
        %v316 = vmul.f32 %v314, 0.5
        %v317 = vmul.f32 %v314, 0.70710677
        %v318 = vmul.f32 %v317, %v317
        %v319 = vmin.f32 16.0, %v318
        %v320 = vmul.f32 %v319, 2.1237322e-06
        %v321 = vadd.f32 %v320, 0.00028619796
        %v322 = vmul.f32 %v319, %v321
        %v323 = vadd.f32 %v322, 0.0036580483
        %v324 = vmul.f32 %v319, %v323
        %v325 = vadd.f32 %v324, 0.05243302
        %v326 = vmul.f32 %v319, %v325
        %v327 = vadd.f32 %v326, 0.18741608
        %v328 = vmul.f32 %v319, %v327
        %v329 = vadd.f32 %v328, 1.1283791
        %v330 = vmul.f32 %v317, %v329
        %v331 = vmul.f32 %v319, 3.8918573e-05
        %v332 = vadd.f32 %v331, 0.001143296
        %v333 = vmul.f32 %v319, %v332
        %v334 = vadd.f32 %v333, 0.014752088
        %v335 = vmul.f32 %v319, %v334
        %v336 = vadd.f32 %v335, 0.112945676
        %v337 = vmul.f32 %v319, %v336
        %v338 = vadd.f32 %v337, 0.4994258
        %v339 = vmul.f32 %v319, %v338
        %v340 = vadd.f32 %v339, 1.0
        %v341 = vrcp.pop %v340
        %v342 = vmul.f32 %v340, %v341
        %v343 = vsub.f32 1.0, %v342
        %v344 = vmul.f32 %v341, %v343
        %v345 = vadd.f32 %v341, %v344
        %vm346 = vweird.f32 %v340
        %vm347 = vweird.f32 %v341
        %vm348 = vmor %vm346, %vm347
        %v349 = vsel %vm348, %v341, %v345
        %v350 = vand.u32 2147483647, %v340
        %vm351 = vcmp.eq.f32.partialorder %v350, 8.507059e+37
        %v352 = vand.u32 %v340, 2147483648
        %v353 = vor.u32 1.1754944e-38, %v352
        %v354 = vsel %vm351, %v353, %v349
        %v355 = vmul.f32 %v330, %v354
        %v356 = vmin.f32 %v355, 1.0
        %v357 = vmax.f32 %v356, -1.0
        %v358 = vadd.f32 %v357, 1.0
        %v359 = vmul.f32 %v316, %v358
        %v360 = vld [vmem:[#allocation7] sm:$0xff]
        %v361 = vld [vmem:[#allocation7 + $0x8] sm:$0xff]
        %v362 = vld [vmem:[#allocation7 + $0x10] sm:$0xff]
        %v363 = vld [vmem:[#allocation7 + $0x18] sm:$0xff]
        %v364 = vld [vmem:[#allocation7 + $0x20] sm:$0xff]
        %v365 = vld [vmem:[#allocation7 + $0x28] sm:$0xff]
        %v366 = vld [vmem:[#allocation7 + $0x30] sm:$0xff]
        %v367 = vld [vmem:[#allocation7 + $0x38] sm:$0xff]
        %v368 = vld [vmem:[#allocation7 + $0x40] sm:$0xff]
        %v369 = vld [vmem:[#allocation7 + $0x48] sm:$0xff]
        %v370 = vld [vmem:[#allocation7 + $0x50] sm:$0xff]
        %v371 = vld [vmem:[#allocation7 + $0x58] sm:$0xff]
        %v372 = vld [vmem:[#allocation7 + $0x60] sm:$0xff]
        %v373 = vld [vmem:[#allocation7 + $0x68] sm:$0xff]
        %v374 = vld [vmem:[#allocation7 + $0x70] sm:$0xff]
        %v375 = vld [vmem:[#allocation7 + $0x78] sm:$0xff]
        %v376 = vld [vmem:[%s4] sm:$0x1]
        %v378 = vperm.slane %v376, 0
        %380 = vmatpush.msra.mxu0 %v375
        %381 = vmatpush.msra.mxu0 %v374
        %382 = vmatpush.msra.mxu0 %v373
        %383 = vmatpush.msra.mxu0 %v372
        %384 = vmatpush.msra.mxu0 %v371
        %385 = vmatpush.msra.mxu0 %v370
        %386 = vmatpush.msra.mxu0 %v369
        %387 = vmatpush.msra.mxu0 %v368
        %388 = vmatpush.msra.mxu0 %v367
        %389 = vmatpush.msra.mxu0 %v366
        %390 = vmatpush.msra.mxu0 %v365
        %391 = vmatpush.msra.mxu0 %v364
        %392 = vmatpush.msra.mxu0 %v363
        %393 = vmatpush.msra.mxu0 %v362
        %394 = vmatpush.msra.mxu0 %v361
        %395 = vmatpush.msra.mxu0 %v360
        %396 = vmatmul.f32.gmra.mxu0 %v359
        %v397 = vpop.f32.mrf.mxu0
        %v398 = vadd.f32 %v378, %v397
        %399 = vdwg.mxu0
        %v400 = vmul.f32 %v398, 0.5
        %v401 = vmul.f32 %v398, 0.70710677
        %v402 = vmul.f32 %v401, %v401
        %v403 = vmin.f32 16.0, %v402
        %v404 = vmul.f32 %v403, 2.1237322e-06
        %v405 = vadd.f32 %v404, 0.00028619796
        %v406 = vmul.f32 %v403, %v405
        %v407 = vadd.f32 %v406, 0.0036580483
        %v408 = vmul.f32 %v403, %v407
        %v409 = vadd.f32 %v408, 0.05243302
        %v410 = vmul.f32 %v403, %v409
        %v411 = vadd.f32 %v410, 0.18741608
        %v412 = vmul.f32 %v403, %v411
        %v413 = vadd.f32 %v412, 1.1283791
        %v414 = vmul.f32 %v401, %v413
        %v415 = vmul.f32 %v403, 3.8918573e-05
        %v416 = vadd.f32 %v415, 0.001143296
        %v417 = vmul.f32 %v403, %v416
        %v418 = vadd.f32 %v417, 0.014752088
        %v419 = vmul.f32 %v403, %v418
        %v420 = vadd.f32 %v419, 0.112945676
        %v421 = vmul.f32 %v403, %v420
        %v422 = vadd.f32 %v421, 0.4994258
        %v423 = vmul.f32 %v403, %v422
        %v424 = vadd.f32 %v423, 1.0
        %v425 = vrcp.pop %v424
        %v426 = vmul.f32 %v424, %v425
        %v427 = vsub.f32 1.0, %v426
        %v428 = vmul.f32 %v425, %v427
        %v429 = vadd.f32 %v425, %v428
        %vm430 = vweird.f32 %v424
        %vm431 = vweird.f32 %v425
        %vm432 = vmor %vm430, %vm431
        %v433 = vsel %vm432, %v425, %v429
        %v434 = vand.u32 2147483647, %v424
        %vm435 = vcmp.eq.f32.partialorder %v434, 8.507059e+37
        %v436 = vand.u32 %v424, 2147483648
        %v437 = vor.u32 1.1754944e-38, %v436
        %v438 = vsel %vm435, %v437, %v433
        %v439 = vmul.f32 %v414, %v438
        %v440 = vmin.f32 %v439, 1.0
        %v441 = vmax.f32 %v440, -1.0
        %v442 = vadd.f32 %v441, 1.0
        %v443 = vmul.f32 %v400, %v442
        %444 = vst [vmem:[%s274] sm:$0xff] %v443
        %s445 = sand.u32 %s141, 1
        %s446 = scalar_lea.sflag [#allocation4], %s445
        %s447 = sand.u32 %s141, 1
        %s448 = smul.addr %s447, 8
        %s449 = scalar_lea.vmem [#allocation8], %s448
        // Predicated region
        $region53: #{tpu_custom_call.1} parent=39 // pred_check
          %p450 = pneg %p151
        $region54: #{tpu_custom_call.1} parent=39 // pred_check_branch
          %452 = sbr.rel (%p450) target = $region56
        $region55: #{tpu_custom_call.1} parent=39 // pred_region
          %454 = vsyncadd %s446, 0
          %s455 = smul.addr %s23, 8
          %s456 = scalar_lea.hbm %s5, %s455
          %s458 = sshll.u32 %s449, 4
          %s459 = int_to_ptr.vmem [resolvable:$true] %s458
          %s460 = sshll.u32 %s456, 4
          %s461 = int_to_ptr.hbm [resolvable:$true] %s460
          %463 = dma.vmem_to_hbm [thread:$0]  %s459, 128, %s461, %s446
        $region56: #{tpu_custom_call.1} parent=39 // pred_fallthru
          _
      $region40: #{tpu_custom_call.1} parent=5 // pred_fallthru
        _
      %p464 = scmp.le.s32.totalorder 2, %s18
      // Predicated region
      $region57: #{tpu_custom_call.1} parent=5 // pred_check
        %p465 = pneg %p464
      $region58: #{tpu_custom_call.1} parent=5 // pred_check_branch
        %467 = sbr.rel (%p465) target = $region60
      $region59: #{tpu_custom_call.1} parent=5 // pred_region
        %s468 = ssub.s32 %s18, 2
        // Predicated region
        $region61: #{tpu_custom_call.1} parent=59 // pred_check
          %p469 = pneg %p157
        $region62: #{tpu_custom_call.1} parent=59 // pred_check_branch
          %471 = sbr.rel (%p469) target = $region64
        $region63: #{tpu_custom_call.1} parent=59 // pred_region
          %s472 = sand.u32 %s142, 1
          %s473 = scalar_lea.sflag [#allocation4], %s472
          %s474 = sand.u32 %s142, 1
          %s475 = smul.addr %s474, 8
          %s476 = scalar_lea.vmem [#allocation8], %s475
          %478 = dma.done %s473, 128
        $region64: #{tpu_custom_call.1} parent=59 // pred_fallthru
          _
      $region60: #{tpu_custom_call.1} parent=5 // pred_fallthru
        _
    $region6: #{tpu_custom_call.1} parent=1 // loop_footer
      %s22 = sadd.s32 1, %s18
    $region7: #{tpu_custom_call.1} parent=1 // loop_footer_branch
      %17 = sbr.rel target = $region3
    $region8: #{tpu_custom_call.1} parent=1 // loop_exit
      _
    %479 = vsyncpa [#allocation3], 1
    %s480 = scalar_lea.sflag [#allocation3], 1
    %481 = vsyncpa %s480, 1
    %482 = vsyncpa [#allocation6], 1
    %483 = vsyncpa [#allocation4], 1
    %s484 = scalar_lea.sflag [#allocation4], 1
    %485 = vsyncpa %s484, 1

</llo_original>
